<compile_context>
chip_gen: v6e
topology: v6e:2x2x1
jax: 0.10.0
libtpu: 0.0.40
codegen_flags: <defaults>
</compile_context>

<pallas_src>
import functools

import jax
import jax.numpy as jnp
from jax.experimental import pallas as pl
from jax.experimental.pallas import tpu as pltpu


def _round_up(x, m):
    return (x + m - 1) // m * m


def _sublane_align(dtype):
    # f32 -> 8, bf16 -> 16, int8/fp8 -> 32 (packed sublanes).
    return max(8, 32 // jnp.dtype(dtype).itemsize)


def _pick_tile_n(N, Hp, in_bytes, out_bytes, align, vmem_budget, max_tile):
    """Pick a row tile that fits the VMEM budget and keeps >=2 grid steps."""
    # Resident stacked weight (assume double-buffered by the pipeline) + bias.
    resident = 2 * (2 * Hp * Hp * in_bytes) + Hp * 4
    # Per-row cost of the double-buffered x, m and out tiles.
    per_row = 2 * (2 * Hp * in_bytes + Hp * out_bytes)
    avail = max(vmem_budget - resident, per_row * align)
    tile = min(max_tile, max(align, (avail // per_row) // align * align))
    # Give the v7x megacore at least 2 grid steps when there are enough rows.
    if N > align:
        tile = min(tile, _round_up(-(-N // 2), align))
    # Never larger than the (align-rounded) row count, never below align.
    tile = max(align, min(tile, _round_up(N, align)))
    return int(tile)


def _encoder_update_kernel(x_ref, m_ref, w_ref, b_ref, o_ref):
    # Two accumulating MXU passes (no concat copy):  acc = x@Wx + m@Wm
    acc = jnp.dot(x_ref[...], w_ref[0], preferred_element_type=jnp.float32)
    acc = acc + jnp.dot(m_ref[...], w_ref[1], preferred_element_type=jnp.float32)
    acc = acc + b_ref[...]                       # f32 bias add (v5e-safe epilogue)
    o_ref[...] = jnp.maximum(acc, 0.0).astype(o_ref.dtype)


def prepare_encoder_params(W, b, hidden_size, dtype=jnp.bfloat16):
    """One-time parameter prep (hoisted out of the per-step hot path).

    Splits the nn.Linear weight W (H, 2H) into its x-part and m-part, transposes
    them, zero-pads to a lane-aligned Hp and stacks into a (2, Hp, Hp) tensor in
    the compute dtype. Zero padding contributes nothing; padded output columns
    come out as relu(0) = 0 and are sliced away by the wrapper. Bias stays f32.
    """
    H = hidden_size
    Hp = _round_up(H, 128)
    pad = ((0, Hp - H), (0, Hp - H))
    wx_t = jnp.pad(W[:, :H].T, pad)                       # (Hp, Hp), acts on x
    wm_t = jnp.pad(W[:, H:].T, pad)                       # (Hp, Hp), acts on m
    w_stk = jnp.stack([wx_t, wm_t], axis=0).astype(dtype)  # (2, Hp, Hp)
    b2d = jnp.pad(b, (0, Hp - H)).reshape(1, Hp).astype(jnp.float32)
    return w_stk, b2d


@functools.partial(
    jax.jit, static_argnames=("out_dtype", "max_tile_n", "vmem_budget_bytes"))
def encoder_gather_update(x, m, w_stk, b2d, *, out_dtype=None,
                          max_tile_n=1024, vmem_budget_bytes=24 * 1024 * 1024):
    """x, m: (N, H)  ->  h = relu(Linear(concat([x, m], 1))) : (N, H)."""
    N, H = x.shape
    assert m.shape == (N, H)
    two, Hp, Hp2 = w_stk.shape
    assert two == 2 and Hp == Hp2 and Hp >= H
    assert b2d.shape == (1, Hp)

    in_dtype = w_stk.dtype
    out_dtype = out_dtype or in_dtype
    # Cast activations to the compute dtype (ideally the caller already keeps
    # x/m in bf16 across the message-passing loop, making this a no-op).
    x = x.astype(in_dtype)
    m = m.astype(in_dtype)

    # Feature padding only when H is not lane-aligned (zero columns are inert).
    if Hp != H:
        x = jnp.pad(x, ((0, 0), (0, Hp - H)))
        m = jnp.pad(m, ((0, 0), (0, Hp - H)))

    in_bytes = jnp.dtype(in_dtype).itemsize
    out_bytes = jnp.dtype(out_dtype).itemsize
    align = max(_sublane_align(in_dtype), _sublane_align(out_dtype))
    tile_n = _pick_tile_n(N, Hp, in_bytes, out_bytes, align,
                          vmem_budget_bytes, max_tile_n)
    grid = (pl.cdiv(N, tile_n),)   # row remainder handled by the pipeline mask

    flops = 2 * N * (2 * Hp) * Hp
    bytes_accessed = (2 * N * Hp * in_bytes + N * Hp * out_bytes
                      + 2 * Hp * Hp * in_bytes + Hp * 4)

    out = pl.pallas_call(
        _encoder_update_kernel,
        out_shape=jax.ShapeDtypeStruct((N, Hp), out_dtype),
        grid=grid,
        in_specs=[
            pl.BlockSpec((tile_n, Hp), lambda i: (i, 0)),     # x tile (pipelined)
            pl.BlockSpec((tile_n, Hp), lambda i: (i, 0)),     # m tile (pipelined)
            pl.BlockSpec((2, Hp, Hp), lambda i: (0, 0, 0)),   # stacked W (resident)
            pl.BlockSpec((1, Hp), lambda i: (0, 0)),          # bias f32 (resident)
        ],
        out_specs=pl.BlockSpec((tile_n, Hp), lambda i: (i, 0)),
        compiler_params=pltpu.CompilerParams(
            dimension_semantics=("parallel",),
            vmem_limit_bytes=32 * 1024 * 1024,
        ),
        cost_estimate=pl.CostEstimate(
            flops=flops, transcendentals=0, bytes_accessed=bytes_accessed),
    )(x, m, w_stk, b2d)

    # Strip feature padding only when it exists (no-op slice otherwise).
    return out if Hp == H else out[:, :H]


if __name__ == "__main__":
    hidden_size = 32
    n_nodes = 16

    key = jax.random.PRNGKey(0)
    kx, km, kw, kb = jax.random.split(key, 4)

    x = jax.random.normal(kx, (n_nodes, hidden_size), dtype=jnp.float32)
    m = jax.random.normal(km, (n_nodes, hidden_size), dtype=jnp.float32)

    # Deterministic parameter init (mimics nn.Linear uniform(-1/sqrt(in), ..)).
    bound = 1.0 / jnp.sqrt(2.0 * hidden_size)
    W = jax.random.uniform(kw, (hidden_size, 2 * hidden_size),
                           minval=-bound, maxval=bound, dtype=jnp.float32)
    b = jax.random.uniform(kb, (hidden_size,),
                           minval=-bound, maxval=bound, dtype=jnp.float32)

    # One-time weight prep (outside the per-message-passing-step hot path).
    w_stk, b2d = prepare_encoder_params(W, b, hidden_size, dtype=jnp.bfloat16)

    h = encoder_gather_update(x, m, w_stk, b2d)
    h = jax.block_until_ready(h)

    # Reference with the same bf16 rounding of inputs/weights and f32 accumulate
    # (exactly what the MXU computes), matching the PyTorch module semantics.
    xb = x.astype(jnp.bfloat16).astype(jnp.float32)
    mb = m.astype(jnp.bfloat16).astype(jnp.float32)
    Wb = W.astype(jnp.bfloat16).astype(jnp.float32)
    h_ref = jax.nn.relu(jnp.concatenate([xb, mb], axis=1) @ Wb.T + b)

    assert h.shape == (n_nodes, hidden_size)
    err = float(jnp.max(jnp.abs(h.astype(jnp.float32) - h_ref)))
    # Output is stored in bf16, so allow bf16-level rounding on top of the
    # exactly-accumulated reference.
    assert err <= 2e-2, f"mismatch vs reference: max abs err {err}"

    print("KERNEL_OK")
</pallas_src>

<mosaic_0001>
module attributes {stable_mosaic.version = 11 : i64} {
  func.func @_encoder_update_kernel(%arg0: i32, %arg1: memref<16x128xbf16, #tpu.memory_space<vmem>>, %arg2: memref<16x128xbf16, #tpu.memory_space<vmem>>, %arg3: memref<2x128x128xbf16, #tpu.memory_space<vmem>>, %arg4: memref<1x128xf32, #tpu.memory_space<vmem>>, %arg5: memref<16x128xbf16, #tpu.memory_space<vmem>>) attributes {dimension_semantics = [#tpu.dimension_semantics<parallel>], iteration_bounds = array<i64: 1>, scalar_prefetch = 0 : i64, scratch_operands = 0 : i64, tpu.core_type = #tpu.core_type<tc>, window_params = [{transform_indices = @transform_0, window_bounds = array<i64: 16, 128>}, {transform_indices = @transform_1, window_bounds = array<i64: 16, 128>}, {pipeline_mode = #tpu.pipeline_mode<synchronous>, transform_indices = @transform_2, window_bounds = array<i64: 2, 128, 128>}, {pipeline_mode = #tpu.pipeline_mode<synchronous>, transform_indices = @transform_3, window_bounds = array<i64: 1, 128>}, {transform_indices = @transform_4, window_bounds = array<i64: 16, 128>}]} {
    %c0 = arith.constant 0 : index
    %c0_0 = arith.constant 0 : index
    %0 = vector.load %arg1[%c0, %c0_0] : memref<16x128xbf16, #tpu.memory_space<vmem>>, vector<16x128xbf16>
    %c0_1 = arith.constant 0 : index
    %c0_2 = arith.constant 0 : index
    %c0_3 = arith.constant 0 : index
    %1 = vector.load %arg3[%c0_1, %c0_2, %c0_3] : memref<2x128x128xbf16, #tpu.memory_space<vmem>>, vector<1x128x128xbf16>
    %2 = vector.shape_cast %1 : vector<1x128x128xbf16> to vector<128x128xbf16>
    %cst = arith.constant dense<0.000000e+00> : vector<16x128xf32>
    %3 = tpu.matmul %0, %2, %cst {dimension_numbers = #tpu.dot_dimension_numbers<[1], [0], [0], [1], [0, 0, 1, 1], [], []>} : vector<16x128xbf16>, vector<128x128xbf16>, vector<16x128xf32> -> vector<16x128xf32>
    %c0_4 = arith.constant 0 : index
    %c0_5 = arith.constant 0 : index
    %4 = vector.load %arg2[%c0_4, %c0_5] : memref<16x128xbf16, #tpu.memory_space<vmem>>, vector<16x128xbf16>
    %c1 = arith.constant 1 : index
    %c0_6 = arith.constant 0 : index
    %c0_7 = arith.constant 0 : index
    %5 = vector.load %arg3[%c1, %c0_6, %c0_7] : memref<2x128x128xbf16, #tpu.memory_space<vmem>>, vector<1x128x128xbf16>
    %6 = vector.shape_cast %5 : vector<1x128x128xbf16> to vector<128x128xbf16>
    %cst_8 = arith.constant dense<0.000000e+00> : vector<16x128xf32>
    %7 = tpu.matmul %4, %6, %cst_8 {dimension_numbers = #tpu.dot_dimension_numbers<[1], [0], [0], [1], [0, 0, 1, 1], [], []>} : vector<16x128xbf16>, vector<128x128xbf16>, vector<16x128xf32> -> vector<16x128xf32>
    %8 = arith.addf %3, %7 : vector<16x128xf32>
    %c0_9 = arith.constant 0 : index
    %c0_10 = arith.constant 0 : index
    %9 = vector.load %arg4[%c0_9, %c0_10] : memref<1x128xf32, #tpu.memory_space<vmem>>, vector<1x128xf32>
    %10 = vector.broadcast %9 : vector<1x128xf32> to vector<16x128xf32>
    %11 = arith.addf %8, %10 : vector<16x128xf32>
    %cst_11 = arith.constant 0.000000e+00 : f32
    %12 = vector.broadcast %cst_11 : f32 to vector<16x128xf32>
    %13 = arith.maximumf %11, %12 : vector<16x128xf32>
    %14 = arith.truncf %13 : vector<16x128xf32> to vector<16x128xbf16>
    %c0_12 = arith.constant 0 : index
    %c0_13 = arith.constant 0 : index
    %15 = vector.load %arg5[%c0_12, %c0_13] : memref<16x128xbf16, #tpu.memory_space<vmem>>, vector<16x128xbf16>
    tpu.vector_store %arg5[%c0_12, %c0_13], %14 {strides = array<i32>} : memref<16x128xbf16, #tpu.memory_space<vmem>>, vector<16x128xbf16>,
    return
  }
  func.func @transform_0(%arg0: i32) -> (i32, i32) {
    %c0_i32 = arith.constant 0 : i32
    %c0_i32_0 = arith.constant 0 : i32
    return %arg0, %c0_i32 : i32, i32
  }
  func.func @transform_1(%arg0: i32) -> (i32, i32) {
    %c0_i32 = arith.constant 0 : i32
    %c0_i32_0 = arith.constant 0 : i32
    return %arg0, %c0_i32 : i32, i32
  }
  func.func @transform_2(%arg0: i32) -> (i32, i32, i32) {
    %c0_i32 = arith.constant 0 : i32
    %c0_i32_0 = arith.constant 0 : i32
    %c0_i32_1 = arith.constant 0 : i32
    %c0_i32_2 = arith.constant 0 : i32
    return %c0_i32, %c0_i32_0, %c0_i32_1 : i32, i32, i32
  }
  func.func @transform_3(%arg0: i32) -> (i32, i32) {
    %c0_i32 = arith.constant 0 : i32
    %c0_i32_0 = arith.constant 0 : i32
    %c0_i32_1 = arith.constant 0 : i32
    return %c0_i32, %c0_i32_0 : i32, i32
  }
  func.func @transform_4(%arg0: i32) -> (i32, i32) {
    %c0_i32 = arith.constant 0 : i32
    %c0_i32_0 = arith.constant 0 : i32
    return %arg0, %c0_i32 : i32, i32
  }
}

</mosaic_0001>

<llo_original>
// kernel: encoder_gather_update.1
$region0: #{encoder_gather_update.1}
  #allocation0 [shape = 'u32[]', space=smem, size = 0x4, offset = 0x4, fixed_abs, tag = 'smem constant byte address 0x4 - core index']
  #allocation1 [shape = 'u32[144,128]{1,0:T(1,128)}', space=vmem, size = 0x12000, scoped, tag = 'internal scratch']
  %s0 = inlined_call_operand.vmem [shape: bf16[16,128], index: 0, kind: input, shape index: {}]
  %s1 = inlined_call_operand.vmem [shape: bf16[16,128], index: 1, kind: input, shape index: {}]
  %s2 = inlined_call_operand.hbm [shape: bf16[2,128,128], index: 2, kind: input, shape index: {}]
  %s3 = inlined_call_operand.vmem [shape: f32[1,128], index: 3, kind: input, shape index: {}]
  %s4 = inlined_call_operand.hbm [shape: bf16[16,128], index: 4, kind: output, shape index: {}]
  %s5 = sld [smem:[#allocation0]]
  $region30: #{encoder_gather_update.1} parent=0
    _
  %s7 = ssub.s32 1, %s5
  %s8 = scalar_select 0, %s7, %s5
  $region1: #{encoder_gather_update.1} parent=0
    #allocation2 [shape = 'u8[65536]{0}', space=vmem, size = 0x10000, scoped, tag = 'input window, operand 2, single buffered']
    #allocation3 [shape = 's32[1]{0}', space=sflag, size = 0x4, scoped, tag = 'scoped memory for encoder_gather_update.1']
    #allocation4 [shape = 's32[1]{0}', space=sflag, size = 0x4, scoped, tag = 'scoped memory for encoder_gather_update.1']
    #allocation5 [shape = 'u8[4096]{0}', space=vmem, size = 0x1000, scoped, tag = 'output window, operand 0, single buffered']
    %9 = vsyncpa [#allocation3], 0
    %10 = vsyncpa [#allocation4], 0
    // Predicated region
    $region2: #{encoder_gather_update.1} parent=1 // pred_check
      _
    $region3: #{encoder_gather_update.1} parent=1 // pred_check_branch
      %12 = sbr.rel (0) target = $region5
    $region4: #{encoder_gather_update.1} parent=1 // pred_region
      _
    $region5: #{encoder_gather_update.1} parent=1 // pred_fallthru
      _
    // Predicated region
    $region6: #{encoder_gather_update.1} parent=1 // pred_check
      _
    $region7: #{encoder_gather_update.1} parent=1 // pred_check_branch
      %14 = sbr.rel (0) target = $region9
    $region8: #{encoder_gather_update.1} parent=1 // pred_region
      _
    $region9: #{encoder_gather_update.1} parent=1 // pred_fallthru
      _
    // Predicated region
    $region10: #{encoder_gather_update.1} parent=1 // pred_check
      _
    $region11: #{encoder_gather_update.1} parent=1 // pred_check_branch
      %16 = sbr.rel (0) target = $region13
    $region12: #{encoder_gather_update.1} parent=1 // pred_region
      %s18 = ssub.s32 2048, 2048
      %19 = vsyncadd [#allocation3], %s18
      %s20 = sshll.u32 [#allocation2], 4
      %s21 = int_to_ptr.vmem [resolvable:$true] %s20
      %26 = dma.hbm_to_vmem [thread:$0]  %s2, 2048, %s21, [#allocation3], 64, 64, 4
    $region13: #{encoder_gather_update.1} parent=1 // pred_fallthru
      _
    // Predicated region
    $region14: #{encoder_gather_update.1} parent=1 // pred_check
      _
    $region15: #{encoder_gather_update.1} parent=1 // pred_check_branch
      %28 = sbr.rel (0) target = $region17
    $region16: #{encoder_gather_update.1} parent=1 // pred_region
      _
    $region17: #{encoder_gather_update.1} parent=1 // pred_fallthru
      _
    // Predicated region
    $region18: #{encoder_gather_update.1} parent=1 // pred_check
      _
    $region19: #{encoder_gather_update.1} parent=1 // pred_check_branch
      %30 = sbr.rel (0) target = $region21
    $region20: #{encoder_gather_update.1} parent=1 // pred_region
      %31 = dma.done [#allocation3], 2048
    $region21: #{encoder_gather_update.1} parent=1 // pred_fallthru
      _
    %v33 = vld [vmem:[%s0] sm:$0xf]
    %v34 = vld [vmem:[%s0 + $0x4] sm:$0xf]
    %v35 = vld [vmem:[#allocation2] sm:$0xf]
    %v36 = vld [vmem:[#allocation2 + $0x4] sm:$0xf]
    %v37 = vld [vmem:[#allocation2 + $0x8] sm:$0xf]
    %v38 = vld [vmem:[#allocation2 + $0xc] sm:$0xf]
    %v39 = vld [vmem:[#allocation2 + $0x10] sm:$0xf]
    %v40 = vld [vmem:[#allocation2 + $0x14] sm:$0xf]
    %v41 = vld [vmem:[#allocation2 + $0x18] sm:$0xf]
    %v42 = vld [vmem:[#allocation2 + $0x1c] sm:$0xf]
    %v43 = vld [vmem:[#allocation2 + $0x20] sm:$0xf]
    %v44 = vld [vmem:[#allocation2 + $0x24] sm:$0xf]
    %v45 = vld [vmem:[#allocation2 + $0x28] sm:$0xf]
    %v46 = vld [vmem:[#allocation2 + $0x2c] sm:$0xf]
    %v47 = vld [vmem:[#allocation2 + $0x30] sm:$0xf]
    %v48 = vld [vmem:[#allocation2 + $0x34] sm:$0xf]
    %v49 = vld [vmem:[#allocation2 + $0x38] sm:$0xf]
    %v50 = vld [vmem:[#allocation2 + $0x3c] sm:$0xf]
    %v51 = vld [vmem:[%s1] sm:$0xf]
    %v52 = vld [vmem:[%s1 + $0x4] sm:$0xf]
    %s53 = scalar_lea.vmem [#allocation2], 64
    %v54 = vld [vmem:[%s53] sm:$0xf]
    %v55 = vld [vmem:[%s53 + $0x4] sm:$0xf]
    %v56 = vld [vmem:[%s53 + $0x8] sm:$0xf]
    %v57 = vld [vmem:[%s53 + $0xc] sm:$0xf]
    %v58 = vld [vmem:[%s53 + $0x10] sm:$0xf]
    %v59 = vld [vmem:[%s53 + $0x14] sm:$0xf]
    %v60 = vld [vmem:[%s53 + $0x18] sm:$0xf]
    %v61 = vld [vmem:[%s53 + $0x1c] sm:$0xf]
    %v62 = vld [vmem:[%s53 + $0x20] sm:$0xf]
    %v63 = vld [vmem:[%s53 + $0x24] sm:$0xf]
    %v64 = vld [vmem:[%s53 + $0x28] sm:$0xf]
    %v65 = vld [vmem:[%s53 + $0x2c] sm:$0xf]
    %v66 = vld [vmem:[%s53 + $0x30] sm:$0xf]
    %v67 = vld [vmem:[%s53 + $0x34] sm:$0xf]
    %v68 = vld [vmem:[%s53 + $0x38] sm:$0xf]
    %v69 = vld [vmem:[%s53 + $0x3c] sm:$0xf]
    %v72 = vunpack.c.l.b16 %v51
    %v73 = vunpack.c.l.b16 %v52
    %v74 = vpack.c.b16 %v73, %v72
    %v92 = vunpack.c.l.b16 %v54
    %v93 = vunpack.c.l.b16 %v55
    %v94 = vunpack.c.l.b16 %v56
    %v95 = vunpack.c.l.b16 %v57
    %v96 = vunpack.c.l.b16 %v58
    %v97 = vunpack.c.l.b16 %v59
    %v98 = vunpack.c.l.b16 %v60
    %v99 = vunpack.c.l.b16 %v61
    %v100 = vunpack.c.l.b16 %v62
    %v101 = vunpack.c.l.b16 %v63
    %v102 = vunpack.c.l.b16 %v64
    %v103 = vunpack.c.l.b16 %v65
    %v104 = vunpack.c.l.b16 %v66
    %v105 = vunpack.c.l.b16 %v67
    %v106 = vunpack.c.l.b16 %v68
    %v107 = vunpack.c.l.b16 %v69
    %v108 = vpack.c.b16 %v93, %v92
    %v109 = vpack.c.b16 %v95, %v94
    %v110 = vpack.c.b16 %v97, %v96
    %v111 = vpack.c.b16 %v99, %v98
    %v112 = vpack.c.b16 %v101, %v100
    %v113 = vpack.c.b16 %v103, %v102
    %v114 = vpack.c.b16 %v105, %v104
    %v115 = vpack.c.b16 %v107, %v106
    %124 = vmatprep.subr.bf16.mxu0 0
    %125 = vmatpush1.bf16.msra.mxu0 %v115
    %126 = vmatprep.subr.bf16.mxu0 0
    %127 = vmatpush1.bf16.msra.mxu0 %v114
    %128 = vmatprep.subr.bf16.mxu0 0
    %129 = vmatpush1.bf16.msra.mxu0 %v113
    %130 = vmatprep.subr.bf16.mxu0 0
    %131 = vmatpush1.bf16.msra.mxu0 %v112
    %132 = vmatprep.subr.bf16.mxu0 0
    %133 = vmatpush1.bf16.msra.mxu0 %v111
    %134 = vmatprep.subr.bf16.mxu0 0
    %135 = vmatpush1.bf16.msra.mxu0 %v110
    %136 = vmatprep.subr.bf16.mxu0 0
    %137 = vmatpush1.bf16.msra.mxu0 %v109
    %138 = vmatprep.subr.bf16.mxu0 0
    %139 = vmatpush1.bf16.msra.mxu0 %v108
    %140 = vmatprep.subr.bf16.mxu0 0
    %141 = vmatpush2.bf16.msra.mxu0 0
    %142 = vmatprep.subr.bf16.mxu0 0
    %143 = vmatpush2.bf16.msra.mxu0 0
    %144 = vmatprep.subr.bf16.mxu0 0
    %145 = vmatpush2.bf16.msra.mxu0 0
    %146 = vmatprep.subr.bf16.mxu0 0
    %147 = vmatpush2.bf16.msra.mxu0 0
    %148 = vmatprep.subr.bf16.mxu0 0
    %149 = vmatpush2.bf16.msra.mxu0 0
    %150 = vmatprep.subr.bf16.mxu0 0
    %151 = vmatpush2.bf16.msra.mxu0 0
    %152 = vmatprep.subr.bf16.mxu0 0
    %153 = vmatpush2.bf16.msra.mxu0 0
    %154 = vmatprep.subr.bf16.mxu0 0
    %155 = vmatpush2.bf16.msra.mxu0 0
    %156 = vmatprep.mubr.bf16.mxu0 0
    %157 = vmatmul.mubr.bf16.gmra.mxu0 %v74
    %v158 = vpop.f32.mrf.mxu0
    %v159 = vadd.f32 0.0, %v158
    %v160 = vpop.f32.mrf.mxu0
    %v161 = vpop.f32.mrf.mxu0
    %v162 = vadd.f32 0.0, %v161
    %v163 = vpop.f32.mrf.mxu0
    %164 = vdwg.mxu0
    %v167 = vunpack.c.l.b16 %v33
    %v168 = vunpack.c.l.b16 %v34
    %v169 = vpack.c.b16 %v168, %v167
    %v187 = vunpack.c.l.b16 %v35
    %v188 = vunpack.c.l.b16 %v36
    %v189 = vunpack.c.l.b16 %v37
    %v190 = vunpack.c.l.b16 %v38
    %v191 = vunpack.c.l.b16 %v39
    %v192 = vunpack.c.l.b16 %v40
    %v193 = vunpack.c.l.b16 %v41
    %v194 = vunpack.c.l.b16 %v42
    %v195 = vunpack.c.l.b16 %v43
    %v196 = vunpack.c.l.b16 %v44
    %v197 = vunpack.c.l.b16 %v45
    %v198 = vunpack.c.l.b16 %v46
    %v199 = vunpack.c.l.b16 %v47
    %v200 = vunpack.c.l.b16 %v48
    %v201 = vunpack.c.l.b16 %v49
    %v202 = vunpack.c.l.b16 %v50
    %v203 = vpack.c.b16 %v188, %v187
    %v204 = vpack.c.b16 %v190, %v189
    %v205 = vpack.c.b16 %v192, %v191
    %v206 = vpack.c.b16 %v194, %v193
    %v207 = vpack.c.b16 %v196, %v195
    %v208 = vpack.c.b16 %v198, %v197
    %v209 = vpack.c.b16 %v200, %v199
    %v210 = vpack.c.b16 %v202, %v201
    %219 = vmatprep.subr.bf16.mxu0 0
    %220 = vmatpush1.bf16.msra.mxu0 %v210
    %221 = vmatprep.subr.bf16.mxu0 0
    %222 = vmatpush1.bf16.msra.mxu0 %v209
    %223 = vmatprep.subr.bf16.mxu0 0
    %224 = vmatpush1.bf16.msra.mxu0 %v208
    %225 = vmatprep.subr.bf16.mxu0 0
    %226 = vmatpush1.bf16.msra.mxu0 %v207
    %227 = vmatprep.subr.bf16.mxu0 0
    %228 = vmatpush1.bf16.msra.mxu0 %v206
    %229 = vmatprep.subr.bf16.mxu0 0
    %230 = vmatpush1.bf16.msra.mxu0 %v205
    %231 = vmatprep.subr.bf16.mxu0 0
    %232 = vmatpush1.bf16.msra.mxu0 %v204
    %233 = vmatprep.subr.bf16.mxu0 0
    %234 = vmatpush1.bf16.msra.mxu0 %v203
    %235 = vmatprep.subr.bf16.mxu0 0
    %236 = vmatpush2.bf16.msra.mxu0 0
    %237 = vmatprep.subr.bf16.mxu0 0
    %238 = vmatpush2.bf16.msra.mxu0 0
    %239 = vmatprep.subr.bf16.mxu0 0
    %240 = vmatpush2.bf16.msra.mxu0 0
    %241 = vmatprep.subr.bf16.mxu0 0
    %242 = vmatpush2.bf16.msra.mxu0 0
    %243 = vmatprep.subr.bf16.mxu0 0
    %244 = vmatpush2.bf16.msra.mxu0 0
    %245 = vmatprep.subr.bf16.mxu0 0
    %246 = vmatpush2.bf16.msra.mxu0 0
    %247 = vmatprep.subr.bf16.mxu0 0
    %248 = vmatpush2.bf16.msra.mxu0 0
    %249 = vmatprep.subr.bf16.mxu0 0
    %250 = vmatpush2.bf16.msra.mxu0 0
    %251 = vmatprep.mubr.bf16.mxu0 0
    %252 = vmatmul.mubr.bf16.gmra.mxu0 %v169
    %v253 = vpop.f32.mrf.mxu0
    %v254 = vadd.f32 %v159, %v253
    %v255 = vpop.f32.mrf.mxu0
    %v256 = vpop.f32.mrf.mxu0
    %v257 = vadd.f32 %v162, %v256
    %v258 = vpop.f32.mrf.mxu0
    %259 = vdwg.mxu0
    %v260 = vld [vmem:[%s3] sm:$0x1]
    %v262 = vlaneseq
    %v263 = vshrl.u32 %v262, 7
    %v264 = vsub.s32 0, %v263
    %v265 = vrot.slane %v260, %v264
    %v267 = vadd.f32 %v254, %v265
    %v268 = vadd.f32 %v257, %v265
    %v269 = vmax.f32 %v267, 0.0
    %v270 = vmax.f32 %v268, 0.0
    %v271 = vpack.c.bf16 %v270, %v269
    %v273 = vunpack.c.l.b16 %v271
    %v274 = vunpack.c.h.b16 %v271
    %v275 = vpack.c.b16 %v273, %v273
    %v276 = vpack.c.b16 %v274, %v274
    %279 = vst [vmem:[#allocation5] sm:$0xf] %v275
    %280 = vst [vmem:[#allocation5 + $0x4] sm:$0xf] %v276
    // Predicated region
    $region22: #{encoder_gather_update.1} parent=1 // pred_check
      _
    $region23: #{encoder_gather_update.1} parent=1 // pred_check_branch
      %282 = sbr.rel (0) target = $region25
    $region24: #{encoder_gather_update.1} parent=1 // pred_region
      %s284 = ssub.s32 128, 128
      %285 = vsyncadd [#allocation4], %s284
      %s286 = sshll.u32 [#allocation5], 4
      %s287 = int_to_ptr.vmem [resolvable:$true] %s286
      %292 = dma.vmem_to_hbm [thread:$0]  %s287, 128, %s4, [#allocation4], 64, 64, 4
    $region25: #{encoder_gather_update.1} parent=1 // pred_fallthru
      _
    // Predicated region
    $region26: #{encoder_gather_update.1} parent=1 // pred_check
      _
    $region27: #{encoder_gather_update.1} parent=1 // pred_check_branch
      %294 = sbr.rel (0) target = $region29
    $region28: #{encoder_gather_update.1} parent=1 // pred_region
      %295 = dma.done [#allocation4], 128
    $region29: #{encoder_gather_update.1} parent=1 // pred_fallthru
      _
    %296 = vsyncpa [#allocation3], 1
    %297 = vsyncpa [#allocation4], 1

</llo_original>
